<compile_context>
chip_gen: v7x
topology: tpu7x:2x2x1
jax: 0.10.0
libtpu: 0.0.40
codegen_flags: <defaults>
</compile_context>

<pallas_src>
import functools

import jax
import jax.numpy as jnp
from jax.experimental import pallas as pl
from jax.experimental.pallas import tpu as pltpu


_LANE = 128               # class (output) padding granularity = lane width
_K_TILE = 512             # K tile: multiple of 128 (v5e) and 256 (v6e/v7x) MXU
_W_KTILE_BYTES = 8 << 20  # pad F for K-tiling only when the weight exceeds this


def _round_up(n, m):
    return ((n + m - 1) // m) * m


@functools.lru_cache(maxsize=1)
def _chip_info():
    """(physical VMEM bytes, default scoped-VMEM limit, max batch tile, 2 TCs?)."""
    vmem_phys, default_scoped, max_tb, two_cores = 128 << 20, 16 << 20, 512, False
    kind = ""
    try:
        kind = jax.devices()[0].device_kind.lower()
    except Exception:
        pass
    if "v6" in kind or "trillium" in kind:
        vmem_phys, default_scoped = 128 << 20, 32 << 20
    elif "7" in kind:                               # v7x: 64 MiB/TC, 2 TCs
        vmem_phys, default_scoped = 64 << 20, 32 << 20
        max_tb, two_cores = 1024, True
    elif "v5" in kind and ("lite" in kind or "v5e" in kind):
        vmem_phys, default_scoped = 128 << 20, 16 << 20
    try:                                            # refine with runtime query
        cap = getattr(pltpu.get_tpu_info(), "vmem_capacity_bytes", None)
        if cap:
            vmem_phys = int(cap)
    except Exception:
        pass
    return vmem_phys, default_scoped, max_tb, two_cores


# ----------------------------- kernels ---------------------------------------

def _mxu_operand(x_ref, w_ref):
    x = x_ref[...]
    if x.dtype != w_ref.dtype:
        x = x.astype(w_ref.dtype)      # in-kernel VPU cast (bf16 MXU path)
    return x


def _linear_kernel_direct(x_ref, w_ref, b_ref, o_ref):
    # Single K tile: dot + bias + store.  No scratch, no zero-init.
    acc = jnp.dot(_mxu_operand(x_ref, w_ref), w_ref[...],
                  preferred_element_type=jnp.float32)
    o_ref[...] = (acc + b_ref[...]).astype(o_ref.dtype)


def _linear_kernel_acc_out(x_ref, w_ref, b_ref, o_ref):
    # K-tiled, float32 output: accumulate directly into the k-invariant
    # output block; the bias seeds the accumulator at k == 0.
    k = pl.program_id(2)
    part = jnp.dot(_mxu_operand(x_ref, w_ref), w_ref[...],
                   preferred_element_type=jnp.float32)

    @pl.when(k == 0)
    def _():
        o_ref[...] = b_ref[...] + part

    @pl.when(k != 0)
    def _():
        o_ref[...] = o_ref[...] + part


def _linear_kernel_acc_scratch(x_ref, w_ref, b_ref, o_ref, acc_ref):
    # K-tiled, non-f32 output: f32 scratch accumulator, bias-seeded at k == 0,
    # cast + store once on the last K step.
    k = pl.program_id(2)
    part = jnp.dot(_mxu_operand(x_ref, w_ref), w_ref[...],
                   preferred_element_type=jnp.float32)

    @pl.when(k == 0)
    def _():
        acc_ref[...] = b_ref[...] + part

    @pl.when(k != 0)
    def _():
        acc_ref[...] = acc_ref[...] + part

    @pl.when(k == pl.num_programs(2) - 1)
    def _():
        o_ref[...] = acc_ref[...].astype(o_ref.dtype)


# ----------------------------- parameter prep --------------------------------

def prepare_attribute_decoder_params(weight, bias, *, compute_dtype=None):
    """Hoist per-call glue out of the hot path (call once, reuse).

    weight: (n_classes, inp_feat)  [PyTorch nn.Linear layout]
    bias:   (n_classes,)
    Returns (w_fc, b_fc): w_fc is (F_pad, C_pad) in compute_dtype (or the
    weight dtype), b_fc is (1, C_pad) float32.  C_pad is lane-dense (multiple
    of 128).  F is padded (to a multiple of the K tile) only when the weight
    is big enough that the forward pass may K-tile the reduction.
    """
    C, F = weight.shape
    C_pad = _round_up(max(C, _LANE), _LANE)
    w = weight.T                                            # (F, C), once
    if compute_dtype is not None:
        w = w.astype(compute_dtype)                         # bf16 MXU operands
    w_isz = jnp.dtype(w.dtype).itemsize
    F_pad = F
    if F > _K_TILE and F * C_pad * w_isz > _W_KTILE_BYTES:
        F_pad = _round_up(F, _K_TILE)                       # enables K tiling
    if (F_pad != F) or (C_pad != C):
        w = jnp.pad(w, ((0, F_pad - F), (0, C_pad - C)))
    b = jnp.pad(bias.astype(jnp.float32), (0, C_pad - C)).reshape(1, C_pad)
    return w, b


# ----------------------------- forward ---------------------------------------

def attribute_decoder_forward(x, w_fc, b_fc, n_classes, *, prob=0.5,
                              training=False, block_batch=None):
    """x: (B, inp_feat); w_fc/b_fc from prepare_attribute_decoder_params.
    Returns (B, n_classes) in x.dtype (eval-mode dropout1d == identity)."""
    if training:
        # TODO(synk): implement dropout1d channel masking for training mode.
        raise NotImplementedError("training-mode dropout1d not implemented")
    del prob  # identity in eval mode

    B, F = x.shape
    F_w, C_pad = w_fc.shape
    out_dtype = x.dtype
    x_isz = jnp.dtype(x.dtype).itemsize
    w_isz = jnp.dtype(w_fc.dtype).itemsize
    out_isz = jnp.dtype(out_dtype).itemsize

    vmem_phys, default_scoped, max_tb, two_cores = _chip_info()
    budget = int(0.55 * vmem_phys)

    # --- batch tiling: dtype-packed sublane alignment, no wrapper padding ----
    sub = max(8, 32 // min(x_isz, out_isz))     # 8 rows f32, 16 bf16, 32 int8
    if block_batch is not None:
        tb = max(sub, _round_up(min(block_batch, B), sub))
        n_bt = pl.cdiv(B, tb)
    elif B <= sub:
        tb, n_bt = B, 1
    else:
        B_al = _round_up(B, sub)
        tb = min(B_al, max_tb)
        n_bt = pl.cdiv(B, tb)
        if two_cores and B_al >= 2 * sub:       # even parallel steps -> both TCs
            if n_bt % 2:
                n_bt += 1
            tb = _round_up(pl.cdiv(B_al, n_bt), sub)
            n_bt = pl.cdiv(B, tb)

    # --- N (class) tiling: bound the C-scaled VMEM footprint -----------------
    c_scaled = (2 * tb * C_pad * out_isz                    # out double buffer
                + tb * C_pad * 4                            # worst-case f32 acc
                + 2 * C_pad * 4                             # bias
                + 2 * min(F_w, _K_TILE) * C_pad * w_isz)    # >= 1 weight K slab
    if C_pad <= 512 or c_scaled <= budget // 2:
        tn, n_nt = C_pad, 1
    else:
        tn = 512 if C_pad % 512 == 0 else (256 if C_pad % 256 == 0 else 128)
        n_nt = C_pad // tn

    # --- K (feature) tiling: by bytes; keep the weight resident if it fits ---
    resident_bytes = (2 * tb * F_w * x_isz                       # x dbl buffer
                      + (2 if n_nt > 1 else 1) * F_w * tn * w_isz
                      + 2 * tb * tn * out_isz + tb * tn * 4 + 2 * tn * 4)
    if resident_bytes <= budget or F_w <= _K_TILE or F_w % _K_TILE != 0:
        tk, n_kt = F_w, 1
    else:
        tk, n_kt = _K_TILE, F_w // _K_TILE

    # Feature-dim zero pad only when prep K-padded the weight (reduction
    # correctness); batch dim is never padded (last block overhang discarded).
    xk = x if F_w == F else jnp.pad(x, ((0, 0), (0, F_w - F)))

    # --- kernel / scratch selection -------------------------------------------
    if n_kt == 1:
        kernel, scratch, use_scratch = _linear_kernel_direct, [], False
    elif out_dtype == jnp.float32:
        kernel, scratch, use_scratch = _linear_kernel_acc_out, [], False
    else:
        kernel = _linear_kernel_acc_scratch
        scratch = [pltpu.VMEM((tb, tn), jnp.float32)]
        use_scratch = True

    # --- per-generation VMEM need / limit -------------------------------------
    w_const = (n_nt == 1 and n_kt == 1)         # weight block index never moves
    b_const = (n_nt == 1)
    vmem_need = (2 * tb * tk * x_isz
                 + (1 if w_const else 2) * tk * tn * w_isz
                 + (1 if b_const else 2) * tn * 4
                 + 2 * tb * tn * out_isz
                 + (tb * tn * 4 if use_scratch else 0))
    vmem_limit = None
    if vmem_need > int(0.75 * default_scoped):
        vmem_limit = max(default_scoped,
                         min(int(vmem_need * 1.5) + (2 << 20),
                             int(0.9 * vmem_phys)))

    cost = pl.CostEstimate(
        flops=2 * B * F_w * C_pad,
        transcendentals=0,
        bytes_accessed=(B * F_w * x_isz + F_w * C_pad * w_isz
                        + C_pad * 4 + B * C_pad * out_isz))

    def _launch(single_buffer_consts):
        def _spec(shape, index_map, single):
            if single:
                return pl.BlockSpec(shape, index_map,
                                    pipeline_mode=pl.Buffered(1))
            return pl.BlockSpec(shape, index_map)

        return pl.pallas_call(
            kernel,
            out_shape=jax.ShapeDtypeStruct((B, C_pad), out_dtype),
            grid_spec=pltpu.PrefetchScalarGridSpec(
                num_scalar_prefetch=0,
                grid=(n_bt, n_nt, n_kt),
                in_specs=[
                    pl.BlockSpec((tb, tk), lambda i, j, k: (i, k)),    # x
                    _spec((tk, tn), lambda i, j, k: (k, j),            # weight
                          single_buffer_consts and w_const),
                    _spec((1, tn), lambda i, j, k: (0, j),             # bias
                          single_buffer_consts and b_const),
                ],
                out_specs=pl.BlockSpec((tb, tn), lambda i, j, k: (i, j)),
                scratch_shapes=scratch,
            ),
            compiler_params=pltpu.CompilerParams(
                dimension_semantics=("parallel", "parallel", "arbitrary"),
                vmem_limit_bytes=vmem_limit),
            cost_estimate=cost,
        )(xk, w_fc, b_fc)

    try:
        out = _launch(True)
    except Exception:
        # pipeline_mode=pl.Buffered(1) unsupported on this jax -> plain specs.
        out = _launch(False)

    return out[:, :n_classes] if n_classes != C_pad else out


def init_attribute_decoder_params(key, inp_feat, n_classes, dtype=jnp.float32):
    """Matches the module init: xavier_uniform_ weight, zero bias."""
    bound = (6.0 / (inp_feat + n_classes)) ** 0.5
    weight = jax.random.uniform(
        key, (n_classes, inp_feat), dtype=dtype, minval=-bound, maxval=bound)
    bias = jnp.zeros((n_classes,), dtype=dtype)
    return weight, bias


if __name__ == "__main__":
    key = jax.random.PRNGKey(0)
    k_x, k_w, k_x2 = jax.random.split(key, 3)

    batch, inp_feat, n_classes, prob = 8, 32, 16, 0.5

    x = jax.random.normal(k_x, (batch, inp_feat), dtype=jnp.float32)
    weight, bias = init_attribute_decoder_params(k_w, inp_feat, n_classes)

    # ---- f32 path: exact PyTorch eval semantics ------------------------------
    w_f32, b_f32 = prepare_attribute_decoder_params(weight, bias)
    out = attribute_decoder_forward(x, w_f32, b_f32, n_classes, prob=prob)
    out = jax.block_until_ready(out)
    ref = x @ weight.T + bias
    assert out.shape == (batch, n_classes)
    assert jnp.allclose(out, ref, atol=1e-5, rtol=1e-5)

    # ---- bf16 MXU operands (f32 x cast inside the kernel, f32 accumulate) ----
    w_bf, b_bf = prepare_attribute_decoder_params(
        weight, bias, compute_dtype=jnp.bfloat16)
    out_bf = attribute_decoder_forward(x, w_bf, b_bf, n_classes, prob=prob)
    out_bf = jax.block_until_ready(out_bf)
    ref_bf = (x.astype(jnp.bfloat16).astype(jnp.float32)
              @ weight.T.astype(jnp.bfloat16).astype(jnp.float32)) + bias
    assert out_bf.shape == (batch, n_classes)
    assert jnp.allclose(out_bf, ref_bf, atol=5e-2, rtol=5e-2)

    # ---- batch not a multiple of the sublane tile: partial last block path ---
    x2 = jax.random.normal(k_x2, (12, inp_feat), dtype=jnp.float32)
    out2 = attribute_decoder_forward(x2, w_f32, b_f32, n_classes, prob=prob)
    out2 = jax.block_until_ready(out2)
    ref2 = x2 @ weight.T + bias
    assert out2.shape == (12, n_classes)
    assert jnp.allclose(out2, ref2, atol=1e-5, rtol=1e-5)

    print("KERNEL_OK")
</pallas_src>

<mosaic_0001>
module attributes {stable_mosaic.version = 11 : i64} {
  func.func @_linear_kernel_direct(%arg0: i32, %arg1: i32, %arg2: i32, %arg3: memref<8x32xf32, #tpu.memory_space<vmem>>, %arg4: memref<32x128xf32, #tpu.memory_space<vmem>>, %arg5: memref<1x128xf32, #tpu.memory_space<vmem>>, %arg6: memref<8x128xf32, #tpu.memory_space<vmem>>) attributes {dimension_semantics = [#tpu.dimension_semantics<parallel>, #tpu.dimension_semantics<parallel>, #tpu.dimension_semantics<arbitrary>], iteration_bounds = array<i64: 1, 1, 1>, scalar_prefetch = 0 : i64, scratch_operands = 0 : i64, tpu.core_type = #tpu.core_type<tc>, window_params = [{transform_indices = @transform_0, window_bounds = array<i64: 8, 32>}, {pipeline_mode = #tpu.pipeline_mode<synchronous>, transform_indices = @transform_1, window_bounds = array<i64: 32, 128>}, {pipeline_mode = #tpu.pipeline_mode<synchronous>, transform_indices = @transform_2, window_bounds = array<i64: 1, 128>}, {transform_indices = @transform_3, window_bounds = array<i64: 8, 128>}]} {
    %c0 = arith.constant 0 : index
    %c0_0 = arith.constant 0 : index
    %0 = vector.load %arg3[%c0, %c0_0] : memref<8x32xf32, #tpu.memory_space<vmem>>, vector<8x32xf32>
    %c0_1 = arith.constant 0 : index
    %c0_2 = arith.constant 0 : index
    %1 = vector.load %arg4[%c0_1, %c0_2] : memref<32x128xf32, #tpu.memory_space<vmem>>, vector<32x128xf32>
    %cst = arith.constant dense<0.000000e+00> : vector<8x128xf32>
    %2 = tpu.matmul %0, %1, %cst {dimension_numbers = #tpu.dot_dimension_numbers<[1], [0], [0], [1], [0, 0, 1, 1], [], []>} : vector<8x32xf32>, vector<32x128xf32>, vector<8x128xf32> -> vector<8x128xf32>
    %c0_3 = arith.constant 0 : index
    %c0_4 = arith.constant 0 : index
    %3 = vector.load %arg5[%c0_3, %c0_4] : memref<1x128xf32, #tpu.memory_space<vmem>>, vector<1x128xf32>
    %4 = vector.broadcast %3 : vector<1x128xf32> to vector<8x128xf32>
    %5 = arith.addf %2, %4 : vector<8x128xf32>
    %c0_5 = arith.constant 0 : index
    %c0_6 = arith.constant 0 : index
    %6 = vector.load %arg6[%c0_5, %c0_6] : memref<8x128xf32, #tpu.memory_space<vmem>>, vector<8x128xf32>
    tpu.vector_store %arg6[%c0_5, %c0_6], %5 {strides = array<i32>} : memref<8x128xf32, #tpu.memory_space<vmem>>, vector<8x128xf32>,
    return
  }
  func.func @transform_0(%arg0: i32, %arg1: i32, %arg2: i32) -> (i32, i32) {
    %c0_i32 = arith.constant 0 : i32
    return %arg0, %arg2 : i32, i32
  }
  func.func @transform_1(%arg0: i32, %arg1: i32, %arg2: i32) -> (i32, i32) {
    %c0_i32 = arith.constant 0 : i32
    return %arg2, %arg1 : i32, i32
  }
  func.func @transform_2(%arg0: i32, %arg1: i32, %arg2: i32) -> (i32, i32) {
    %c0_i32 = arith.constant 0 : i32
    %c0_i32_0 = arith.constant 0 : i32
    return %c0_i32, %arg1 : i32, i32
  }
  func.func @transform_3(%arg0: i32, %arg1: i32, %arg2: i32) -> (i32, i32) {
    %c0_i32 = arith.constant 0 : i32
    return %arg0, %arg1 : i32, i32
  }
}

module attributes {stable_mosaic.version = 11 : i64} {
  func.func @_linear_kernel_direct(%arg0: i32, %arg1: i32, %arg2: i32, %arg3: memref<8x32xf32, #tpu.memory_space<vmem>>, %arg4: memref<32x128xf32, #tpu.memory_space<vmem>>, %arg5: memref<1x128xf32, #tpu.memory_space<vmem>>, %arg6: memref<8x128xf32, #tpu.memory_space<vmem>>) attributes {dimension_semantics = [#tpu.dimension_semantics<parallel>, #tpu.dimension_semantics<parallel>, #tpu.dimension_semantics<arbitrary>], iteration_bounds = array<i64: 1, 1, 1>, scalar_prefetch = 0 : i64, scratch_operands = 0 : i64, tpu.core_type = #tpu.core_type<tc>, window_params = [{transform_indices = @transform_0, window_bounds = array<i64: 8, 32>}, {transform_indices = @transform_1, window_bounds = array<i64: 32, 128>}, {transform_indices = @transform_2, window_bounds = array<i64: 1, 128>}, {transform_indices = @transform_3, window_bounds = array<i64: 8, 128>}]} {
    %c0 = arith.constant 0 : index
    %c0_0 = arith.constant 0 : index
    %0 = vector.load %arg3[%c0, %c0_0] : memref<8x32xf32, #tpu.memory_space<vmem>>, vector<8x32xf32>
    %c0_1 = arith.constant 0 : index
    %c0_2 = arith.constant 0 : index
    %1 = vector.load %arg4[%c0_1, %c0_2] : memref<32x128xf32, #tpu.memory_space<vmem>>, vector<32x128xf32>
    %cst = arith.constant dense<0.000000e+00> : vector<8x128xf32>
    %2 = tpu.matmul %0, %1, %cst {dimension_numbers = #tpu.dot_dimension_numbers<[1], [0], [0], [1], [0, 0, 1, 1], [], []>} : vector<8x32xf32>, vector<32x128xf32>, vector<8x128xf32> -> vector<8x128xf32>
    %c0_3 = arith.constant 0 : index
    %c0_4 = arith.constant 0 : index
    %3 = vector.load %arg5[%c0_3, %c0_4] : memref<1x128xf32, #tpu.memory_space<vmem>>, vector<1x128xf32>
    %4 = vector.broadcast %3 : vector<1x128xf32> to vector<8x128xf32>
    %5 = arith.addf %2, %4 : vector<8x128xf32>
    %c0_5 = arith.constant 0 : index
    %c0_6 = arith.constant 0 : index
    %6 = vector.load %arg6[%c0_5, %c0_6] : memref<8x128xf32, #tpu.memory_space<vmem>>, vector<8x128xf32>
    tpu.vector_store %arg6[%c0_5, %c0_6], %5 {strides = array<i32>} : memref<8x128xf32, #tpu.memory_space<vmem>>, vector<8x128xf32>,
    return
  }
  func.func @transform_0(%arg0: i32, %arg1: i32, %arg2: i32) -> (i32, i32) {
    %c0_i32 = arith.constant 0 : i32
    return %arg0, %arg2 : i32, i32
  }
  func.func @transform_1(%arg0: i32, %arg1: i32, %arg2: i32) -> (i32, i32) {
    %c0_i32 = arith.constant 0 : i32
    return %arg2, %arg1 : i32, i32
  }
  func.func @transform_2(%arg0: i32, %arg1: i32, %arg2: i32) -> (i32, i32) {
    %c0_i32 = arith.constant 0 : i32
    %c0_i32_0 = arith.constant 0 : i32
    return %c0_i32, %arg1 : i32, i32
  }
  func.func @transform_3(%arg0: i32, %arg1: i32, %arg2: i32) -> (i32, i32) {
    %c0_i32 = arith.constant 0 : i32
    return %arg0, %arg1 : i32, i32
  }
}

</mosaic_0001>

<llo_original>
// kernel: tpu_custom_call.1
$region0: #{tpu_custom_call.1}
  #allocation0 [shape = 'u32[]', space=smem, size = 0x4, offset = 0x4, fixed_abs, tag = 'smem constant byte address 0x4 - core index']
  #allocation1 [shape = 'u32[144,128]{1,0:T(1,128)}', space=vmem, size = 0x12000, scoped, tag = 'internal scratch']
  %s0 = inlined_call_operand.hbm [shape: f32[8,32], index: 0, kind: input, shape index: {}]
  %s1 = inlined_call_operand.hbm [shape: f32[32,128], index: 1, kind: input, shape index: {}]
  %s2 = inlined_call_operand.vmem [shape: f32[1,128], index: 2, kind: input, shape index: {}]
  %s3 = inlined_call_operand.hbm [shape: f32[8,128], index: 3, kind: output, shape index: {}]
  %s4 = sld [smem:[#allocation0]]
  $region30: #{tpu_custom_call.1} parent=0
    _
  %s6 = ssub.s32 1, %s4
  %s7 = scalar_select 0, %s6, %s4
  $region1: #{tpu_custom_call.1} parent=0
    #allocation2 [shape = 'u8[4096]{0}', space=vmem, size = 0x1000, scoped, tag = 'input window, operand 0, single buffered']
    #allocation3 [shape = 's32[1]{0}', space=sflag, size = 0x4, scoped, tag = 'scoped memory for tpu_custom_call.1']
    #allocation4 [shape = 's32[1]{0}', space=sflag, size = 0x4, scoped, tag = 'scoped memory for tpu_custom_call.1']
    #allocation5 [shape = 'u8[16384]{0}', space=vmem, size = 0x4000, scoped, tag = 'input window, operand 1, single buffered']
    #allocation6 [shape = 's32[1]{0}', space=sflag, size = 0x4, scoped, tag = 'scoped memory for tpu_custom_call.1']
    #allocation7 [shape = 'u8[4096]{0}', space=vmem, size = 0x1000, scoped, tag = 'output window, operand 0, single buffered']
    %8 = vsyncpa [#allocation3], 0
    %9 = vsyncpa [#allocation6], 0
    %10 = vsyncpa [#allocation4], 0
    // Predicated region
    $region2: #{tpu_custom_call.1} parent=1 // pred_check
      _
    $region3: #{tpu_custom_call.1} parent=1 // pred_check_branch
      %12 = sbr.rel (0) target = $region5
    $region4: #{tpu_custom_call.1} parent=1 // pred_region
      %s14 = ssub.s32 128, 128
      %15 = vsyncadd [#allocation3], %s14
      %s17 = sshll.u32 [#allocation2], 4
      %s18 = int_to_ptr.vmem [resolvable:$true] %s17
      %20 = dma.hbm_to_vmem [thread:$0]  %s0, 128, %s18, [#allocation3]
    $region5: #{tpu_custom_call.1} parent=1 // pred_fallthru
      _
    // Predicated region
    $region6: #{tpu_custom_call.1} parent=1 // pred_check
      _
    $region7: #{tpu_custom_call.1} parent=1 // pred_check_branch
      %22 = sbr.rel (0) target = $region9
    $region8: #{tpu_custom_call.1} parent=1 // pred_region
      %s24 = ssub.s32 512, 512
      %25 = vsyncadd [#allocation6], %s24
      %s26 = sshll.u32 [#allocation5], 4
      %s27 = int_to_ptr.vmem [resolvable:$true] %s26
      %32 = dma.hbm_to_vmem [thread:$0]  %s1, 512, %s27, [#allocation6], 128, 128, 8
    $region9: #{tpu_custom_call.1} parent=1 // pred_fallthru
      _
    // Predicated region
    $region10: #{tpu_custom_call.1} parent=1 // pred_check
      _
    $region11: #{tpu_custom_call.1} parent=1 // pred_check_branch
      %34 = sbr.rel (0) target = $region13
    $region12: #{tpu_custom_call.1} parent=1 // pred_region
      _
    $region13: #{tpu_custom_call.1} parent=1 // pred_fallthru
      _
    // Predicated region
    $region14: #{tpu_custom_call.1} parent=1 // pred_check
      _
    $region15: #{tpu_custom_call.1} parent=1 // pred_check_branch
      %36 = sbr.rel (0) target = $region17
    $region16: #{tpu_custom_call.1} parent=1 // pred_region
      %37 = dma.done [#allocation3], 128
    $region17: #{tpu_custom_call.1} parent=1 // pred_fallthru
      _
    // Predicated region
    $region18: #{tpu_custom_call.1} parent=1 // pred_check
      _
    $region19: #{tpu_custom_call.1} parent=1 // pred_check_branch
      %39 = sbr.rel (0) target = $region21
    $region20: #{tpu_custom_call.1} parent=1 // pred_region
      %40 = dma.done [#allocation6], 512
    $region21: #{tpu_custom_call.1} parent=1 // pred_fallthru
      _
    %v41 = vld [vmem:[#allocation2] sm:$0xff]
    %v42 = vld [vmem:[#allocation5] sm:$0xff]
    %v43 = vld [vmem:[#allocation5 + $0x8] sm:$0xff]
    %v44 = vld [vmem:[#allocation5 + $0x10] sm:$0xff]
    %v45 = vld [vmem:[#allocation5 + $0x18] sm:$0xff]
    %v46 = vld [vmem:[%s2] sm:$0x1]
    %v48 = vlaneseq
    %v49 = vshrl.u32 %v48, 7
    %v50 = vsub.s32 0, %v49
    %v51 = vrot.slane %v46, %v50
    %vm53 = vcmask 261120
    %v55 = vsel %vm53, %v41, 0
    %57 = vmatprep.subr.mxu0 0.0
    %58 = vmatpush1.msra.mxu0 %v42
    %59 = vmatprep.subr.mxu0 0.0
    %60 = vmatpush1.msra.mxu0 %v43
    %61 = vmatprep.subr.mxu0 0.0
    %62 = vmatpush1.msra.mxu0 %v44
    %63 = vmatprep.subr.mxu0 0.0
    %64 = vmatpush1.msra.mxu0 %v45
    %65 = vmatprep.subr.mxu0 0.0
    %66 = vmatpush1.msra.mxu0 0.0
    %67 = vmatprep.subr.mxu0 0.0
    %68 = vmatpush1.msra.mxu0 0.0
    %69 = vmatprep.subr.mxu0 0.0
    %70 = vmatpush1.msra.mxu0 0.0
    %71 = vmatprep.subr.mxu0 0.0
    %72 = vmatpush1.msra.mxu0 0.0
    %73 = vmatprep.subr.mxu0 0.0
    %74 = vmatpush1.msra.mxu0 0.0
    %75 = vmatprep.subr.mxu0 0.0
    %76 = vmatpush1.msra.mxu0 0.0
    %77 = vmatprep.subr.mxu0 0.0
    %78 = vmatpush1.msra.mxu0 0.0
    %79 = vmatprep.subr.mxu0 0.0
    %80 = vmatpush1.msra.mxu0 0.0
    %81 = vmatprep.subr.mxu0 0.0
    %82 = vmatpush1.msra.mxu0 0.0
    %83 = vmatprep.subr.mxu0 0.0
    %84 = vmatpush1.msra.mxu0 0.0
    %85 = vmatprep.subr.mxu0 0.0
    %86 = vmatpush1.msra.mxu0 0.0
    %87 = vmatprep.subr.mxu0 0.0
    %88 = vmatpush1.msra.mxu0 0.0
    %89 = vmatprep.subr.mxu0 0.0
    %90 = vmatpush1.msra.mxu0 0.0
    %91 = vmatprep.subr.mxu0 0.0
    %92 = vmatpush1.msra.mxu0 0.0
    %93 = vmatprep.subr.mxu0 0.0
    %94 = vmatpush1.msra.mxu0 0.0
    %95 = vmatprep.subr.mxu0 0.0
    %96 = vmatpush1.msra.mxu0 0.0
    %97 = vmatprep.subr.mxu0 0.0
    %98 = vmatpush1.msra.mxu0 0.0
    %99 = vmatprep.subr.mxu0 0.0
    %100 = vmatpush1.msra.mxu0 0.0
    %101 = vmatprep.subr.mxu0 0.0
    %102 = vmatpush1.msra.mxu0 0.0
    %103 = vmatprep.subr.mxu0 0.0
    %104 = vmatpush1.msra.mxu0 0.0
    %105 = vmatprep.subr.mxu0 0.0
    %106 = vmatpush1.msra.mxu0 0.0
    %107 = vmatprep.subr.mxu0 0.0
    %108 = vmatpush1.msra.mxu0 0.0
    %109 = vmatprep.subr.mxu0 0.0
    %110 = vmatpush1.msra.mxu0 0.0
    %111 = vmatprep.subr.mxu0 0.0
    %112 = vmatpush1.msra.mxu0 0.0
    %113 = vmatprep.subr.mxu0 0.0
    %114 = vmatpush1.msra.mxu0 0.0
    %115 = vmatprep.subr.mxu0 0.0
    %116 = vmatpush1.msra.mxu0 0.0
    %117 = vmatprep.subr.mxu0 0.0
    %118 = vmatpush1.msra.mxu0 0.0
    %119 = vmatprep.subr.mxu0 0.0
    %120 = vmatpush1.msra.mxu0 0.0
    %121 = vmatprep.mubr.f32.mxu0 0.0
    %122 = vmatmul.mubr.f32.gmra.mrb[0].mxu0 %v55
    %v123 = vpop.f32.mrb[0].mxu0
    %v124 = vadd.f32 %v51, %v123
    %v125 = vpop.f32.mrb[0].mxu0
    %126 = vdwg.mxu0
    %127 = vst [vmem:[#allocation7] sm:$0xff] %v124
    // Predicated region
    $region22: #{tpu_custom_call.1} parent=1 // pred_check
      _
    $region23: #{tpu_custom_call.1} parent=1 // pred_check_branch
      %129 = sbr.rel (0) target = $region25
    $region24: #{tpu_custom_call.1} parent=1 // pred_region
      %s131 = ssub.s32 128, 128
      %132 = vsyncadd [#allocation4], %s131
      %s134 = sshll.u32 [#allocation7], 4
      %s135 = int_to_ptr.vmem [resolvable:$true] %s134
      %137 = dma.vmem_to_hbm [thread:$0]  %s135, 128, %s3, [#allocation4]
    $region25: #{tpu_custom_call.1} parent=1 // pred_fallthru
      _
    // Predicated region
    $region26: #{tpu_custom_call.1} parent=1 // pred_check
      _
    $region27: #{tpu_custom_call.1} parent=1 // pred_check_branch
      %139 = sbr.rel (0) target = $region29
    $region28: #{tpu_custom_call.1} parent=1 // pred_region
      %140 = dma.done [#allocation4], 128
    $region29: #{tpu_custom_call.1} parent=1 // pred_fallthru
      _
    %141 = vsyncpa [#allocation3], 1
    %142 = vsyncpa [#allocation6], 1
    %143 = vsyncpa [#allocation4], 1

// kernel: tpu_custom_call.1
$region0: #{tpu_custom_call.1}
  #allocation0 [shape = 'u32[]', space=smem, size = 0x4, offset = 0x4, fixed_abs, tag = 'smem constant byte address 0x4 - core index']
  #allocation1 [shape = 'u32[144,128]{1,0:T(1,128)}', space=vmem, size = 0x12000, scoped, tag = 'internal scratch']
  %s0 = inlined_call_operand.hbm [shape: f32[8,32], index: 0, kind: input, shape index: {}]
  %s1 = inlined_call_operand.hbm [shape: f32[32,128], index: 1, kind: input, shape index: {}]
  %s2 = inlined_call_operand.vmem [shape: f32[1,128], index: 2, kind: input, shape index: {}]
  %s3 = inlined_call_operand.hbm [shape: f32[8,128], index: 3, kind: output, shape index: {}]
  %s4 = sld [smem:[#allocation0]]
  $region30: #{tpu_custom_call.1} parent=0
    _
  %s6 = ssub.s32 1, %s4
  %s7 = scalar_select 0, %s6, %s4
  $region1: #{tpu_custom_call.1} parent=0
    #allocation2 [shape = 'u8[4096]{0}', space=vmem, size = 0x1000, scoped, tag = 'input window, operand 0, single buffered']
    #allocation3 [shape = 's32[1]{0}', space=sflag, size = 0x4, scoped, tag = 'scoped memory for tpu_custom_call.1']
    #allocation4 [shape = 's32[1]{0}', space=sflag, size = 0x4, scoped, tag = 'scoped memory for tpu_custom_call.1']
    #allocation5 [shape = 'u8[16384]{0}', space=vmem, size = 0x4000, scoped, tag = 'input window, operand 1, single buffered']
    #allocation6 [shape = 's32[1]{0}', space=sflag, size = 0x4, scoped, tag = 'scoped memory for tpu_custom_call.1']
    #allocation7 [shape = 'u8[4096]{0}', space=vmem, size = 0x1000, scoped, tag = 'output window, operand 0, single buffered']
    %8 = vsyncpa [#allocation3], 0
    %9 = vsyncpa [#allocation6], 0
    %10 = vsyncpa [#allocation4], 0
    // Predicated region
    $region2: #{tpu_custom_call.1} parent=1 // pred_check
      _
    $region3: #{tpu_custom_call.1} parent=1 // pred_check_branch
      %12 = sbr.rel (0) target = $region5
    $region4: #{tpu_custom_call.1} parent=1 // pred_region
      %s14 = ssub.s32 128, 128
      %15 = vsyncadd [#allocation3], %s14
      %s17 = sshll.u32 [#allocation2], 4
      %s18 = int_to_ptr.vmem [resolvable:$true] %s17
      %20 = dma.hbm_to_vmem [thread:$0]  %s0, 128, %s18, [#allocation3]
    $region5: #{tpu_custom_call.1} parent=1 // pred_fallthru
      _
    // Predicated region
    $region6: #{tpu_custom_call.1} parent=1 // pred_check
      _
    $region7: #{tpu_custom_call.1} parent=1 // pred_check_branch
      %22 = sbr.rel (0) target = $region9
    $region8: #{tpu_custom_call.1} parent=1 // pred_region
      %s24 = ssub.s32 512, 512
      %25 = vsyncadd [#allocation6], %s24
      %s26 = sshll.u32 [#allocation5], 4
      %s27 = int_to_ptr.vmem [resolvable:$true] %s26
      %32 = dma.hbm_to_vmem [thread:$0]  %s1, 512, %s27, [#allocation6], 128, 128, 8
    $region9: #{tpu_custom_call.1} parent=1 // pred_fallthru
      _
    // Predicated region
    $region10: #{tpu_custom_call.1} parent=1 // pred_check
      _
    $region11: #{tpu_custom_call.1} parent=1 // pred_check_branch
      %34 = sbr.rel (0) target = $region13
    $region12: #{tpu_custom_call.1} parent=1 // pred_region
      _
    $region13: #{tpu_custom_call.1} parent=1 // pred_fallthru
      _
    // Predicated region
    $region14: #{tpu_custom_call.1} parent=1 // pred_check
      _
    $region15: #{tpu_custom_call.1} parent=1 // pred_check_branch
      %36 = sbr.rel (0) target = $region17
    $region16: #{tpu_custom_call.1} parent=1 // pred_region
      %37 = dma.done [#allocation3], 128
    $region17: #{tpu_custom_call.1} parent=1 // pred_fallthru
      _
    // Predicated region
    $region18: #{tpu_custom_call.1} parent=1 // pred_check
      _
    $region19: #{tpu_custom_call.1} parent=1 // pred_check_branch
      %39 = sbr.rel (0) target = $region21
    $region20: #{tpu_custom_call.1} parent=1 // pred_region
      %40 = dma.done [#allocation6], 512
    $region21: #{tpu_custom_call.1} parent=1 // pred_fallthru
      _
    %v41 = vld [vmem:[#allocation2] sm:$0xff]
    %v42 = vld [vmem:[#allocation5] sm:$0xff]
    %v43 = vld [vmem:[#allocation5 + $0x8] sm:$0xff]
    %v44 = vld [vmem:[#allocation5 + $0x10] sm:$0xff]
    %v45 = vld [vmem:[#allocation5 + $0x18] sm:$0xff]
    %v46 = vld [vmem:[%s2] sm:$0x1]
    %v48 = vlaneseq
    %v49 = vshrl.u32 %v48, 7
    %v50 = vsub.s32 0, %v49
    %v51 = vrot.slane %v46, %v50
    %vm53 = vcmask 261120
    %v55 = vsel %vm53, %v41, 0
    %57 = vmatprep.subr.mxu0 0.0
    %58 = vmatpush1.msra.mxu0 %v42
    %59 = vmatprep.subr.mxu0 0.0
    %60 = vmatpush1.msra.mxu0 %v43
    %61 = vmatprep.subr.mxu0 0.0
    %62 = vmatpush1.msra.mxu0 %v44
    %63 = vmatprep.subr.mxu0 0.0
    %64 = vmatpush1.msra.mxu0 %v45
    %65 = vmatprep.subr.mxu0 0.0
    %66 = vmatpush1.msra.mxu0 0.0
    %67 = vmatprep.subr.mxu0 0.0
    %68 = vmatpush1.msra.mxu0 0.0
    %69 = vmatprep.subr.mxu0 0.0
    %70 = vmatpush1.msra.mxu0 0.0
    %71 = vmatprep.subr.mxu0 0.0
    %72 = vmatpush1.msra.mxu0 0.0
    %73 = vmatprep.subr.mxu0 0.0
    %74 = vmatpush1.msra.mxu0 0.0
    %75 = vmatprep.subr.mxu0 0.0
    %76 = vmatpush1.msra.mxu0 0.0
    %77 = vmatprep.subr.mxu0 0.0
    %78 = vmatpush1.msra.mxu0 0.0
    %79 = vmatprep.subr.mxu0 0.0
    %80 = vmatpush1.msra.mxu0 0.0
    %81 = vmatprep.subr.mxu0 0.0
    %82 = vmatpush1.msra.mxu0 0.0
    %83 = vmatprep.subr.mxu0 0.0
    %84 = vmatpush1.msra.mxu0 0.0
    %85 = vmatprep.subr.mxu0 0.0
    %86 = vmatpush1.msra.mxu0 0.0
    %87 = vmatprep.subr.mxu0 0.0
    %88 = vmatpush1.msra.mxu0 0.0
    %89 = vmatprep.subr.mxu0 0.0
    %90 = vmatpush1.msra.mxu0 0.0
    %91 = vmatprep.subr.mxu0 0.0
    %92 = vmatpush1.msra.mxu0 0.0
    %93 = vmatprep.subr.mxu0 0.0
    %94 = vmatpush1.msra.mxu0 0.0
    %95 = vmatprep.subr.mxu0 0.0
    %96 = vmatpush1.msra.mxu0 0.0
    %97 = vmatprep.subr.mxu0 0.0
    %98 = vmatpush1.msra.mxu0 0.0
    %99 = vmatprep.subr.mxu0 0.0
    %100 = vmatpush1.msra.mxu0 0.0
    %101 = vmatprep.subr.mxu0 0.0
    %102 = vmatpush1.msra.mxu0 0.0
    %103 = vmatprep.subr.mxu0 0.0
    %104 = vmatpush1.msra.mxu0 0.0
    %105 = vmatprep.subr.mxu0 0.0
    %106 = vmatpush1.msra.mxu0 0.0
    %107 = vmatprep.subr.mxu0 0.0
    %108 = vmatpush1.msra.mxu0 0.0
    %109 = vmatprep.subr.mxu0 0.0
    %110 = vmatpush1.msra.mxu0 0.0
    %111 = vmatprep.subr.mxu0 0.0
    %112 = vmatpush1.msra.mxu0 0.0
    %113 = vmatprep.subr.mxu0 0.0
    %114 = vmatpush1.msra.mxu0 0.0
    %115 = vmatprep.subr.mxu0 0.0
    %116 = vmatpush1.msra.mxu0 0.0
    %117 = vmatprep.subr.mxu0 0.0
    %118 = vmatpush1.msra.mxu0 0.0
    %119 = vmatprep.subr.mxu0 0.0
    %120 = vmatpush1.msra.mxu0 0.0
    %121 = vmatprep.mubr.f32.mxu0 0.0
    %122 = vmatmul.mubr.f32.gmra.mrb[0].mxu0 %v55
    %v123 = vpop.f32.mrb[0].mxu0
    %v124 = vadd.f32 %v51, %v123
    %v125 = vpop.f32.mrb[0].mxu0
    %126 = vdwg.mxu0
    %127 = vst [vmem:[#allocation7] sm:$0xff] %v124
    // Predicated region
    $region22: #{tpu_custom_call.1} parent=1 // pred_check
      _
    $region23: #{tpu_custom_call.1} parent=1 // pred_check_branch
      %129 = sbr.rel (0) target = $region25
    $region24: #{tpu_custom_call.1} parent=1 // pred_region
      %s131 = ssub.s32 128, 128
      %132 = vsyncadd [#allocation4], %s131
      %s134 = sshll.u32 [#allocation7], 4
      %s135 = int_to_ptr.vmem [resolvable:$true] %s134
      %137 = dma.vmem_to_hbm [thread:$0]  %s135, 128, %s3, [#allocation4]
    $region25: #{tpu_custom_call.1} parent=1 // pred_fallthru
      _
    // Predicated region
    $region26: #{tpu_custom_call.1} parent=1 // pred_check
      _
    $region27: #{tpu_custom_call.1} parent=1 // pred_check_branch
      %139 = sbr.rel (0) target = $region29
    $region28: #{tpu_custom_call.1} parent=1 // pred_region
      %140 = dma.done [#allocation4], 128
    $region29: #{tpu_custom_call.1} parent=1 // pred_fallthru
      _
    %141 = vsyncpa [#allocation3], 1
    %142 = vsyncpa [#allocation6], 1
    %143 = vsyncpa [#allocation4], 1

</llo_original>
